<compile_context>
chip_gen: v5e
topology: v5e:2x2
jax: 0.10.0
libtpu: 0.0.40
codegen_flags: <defaults>
</compile_context>

<pallas_src>
import math
from functools import lru_cache

import numpy as np
import jax
import jax.numpy as jnp
from jax.experimental import pallas as pl
from jax.experimental.pallas import tpu as pltpu

EPS = 1e-06


def _round_up(x, m):
    return ((x + m - 1) // m) * m


# ----------------------------------------------------------------------------
# SI-SNR loss kernel (default Loss.forward) -- tiled reduction
# ----------------------------------------------------------------------------
def _snr_rows_kernel(x_ref, s_ref, snr_ref, tnorm_ref, nnorm_ref):
    j = pl.program_id(1)

    @pl.when(j == 0)
    def _():
        tnorm_ref[...] = jnp.zeros_like(tnorm_ref)
        nnorm_ref[...] = jnp.zeros_like(nnorm_ref)

    # load native dtype, square/accumulate in f32 (in-kernel cast is free on VPU)
    x = x_ref[...].astype(jnp.float32)
    s = s_ref[...].astype(jnp.float32)
    e = x - s
    tnorm_ref[...] += jnp.sum(s * s, axis=-1, keepdims=True)   # (TB, 1)
    nnorm_ref[...] += jnp.sum(e * e, axis=-1, keepdims=True)   # (TB, 1)

    @pl.when(j == pl.num_programs(1) - 1)
    def _():
        ratio = tnorm_ref[...] / (nnorm_ref[...] + EPS) + EPS
        # 10 * log10(ratio)
        snr_ref[...] = jnp.float32(10.0 / math.log(10.0)) * jnp.log(ratio)


def snr_loss_pallas(s1, s_target, reduce_mean=True):
    """Pallas equivalent of snr_loss(s1, s_target) for (B, T) signals."""
    B, T = s1.shape

    TB = min(256, _round_up(B, 8))
    Bp = _round_up(B, TB)
    TT = min(2048, _round_up(T, 128))
    Tp = _round_up(T, TT)

    pad_b, pad_t = Bp - B, Tp - T
    if pad_b or pad_t:
        # zero padding is exact: padded samples add 0 to both norms,
        # padded rows are sliced off before the mean.
        s1p = jnp.pad(s1, ((0, pad_b), (0, pad_t)))
        stp = jnp.pad(s_target, ((0, pad_b), (0, pad_t)))
    else:
        s1p, stp = s1, s_target

    snr_rows = pl.pallas_call(
        _snr_rows_kernel,
        out_shape=jax.ShapeDtypeStruct((Bp, 1), jnp.float32),
        grid=(Bp // TB, Tp // TT),
        in_specs=[
            pl.BlockSpec((TB, TT), lambda i, j: (i, j)),
            pl.BlockSpec((TB, TT), lambda i, j: (i, j)),
        ],
        out_specs=pl.BlockSpec((TB, 1), lambda i, j: (i, 0)),   # resident over T axis
        scratch_shapes=[
            pltpu.VMEM((TB, 1), jnp.float32),                   # sum(s*s)
            pltpu.VMEM((TB, 1), jnp.float32),                   # sum(e*e)
        ],
        compiler_params=pltpu.CompilerParams(
            dimension_semantics=("parallel", "arbitrary")),
    )(s1p, stp)

    snr_rows = snr_rows[:B]
    if reduce_mean:
        return jnp.mean(snr_rows)
    return snr_rows


def loss_forward(model_output, targets, loss_mode="SI-SNR"):
    """Equivalent of Loss.forward for the default (and spec'd) SI-SNR mode."""
    if loss_mode == "SI-SNR":
        return -snr_loss_pallas(model_output, targets)
    raise NotImplementedError(
        "Only SI-SNR mode is implemented; MSE/MAE/STOI-SNR depend on external modules.")


# ----------------------------------------------------------------------------
# STFT kernel (torch.stft, return_complex=True) -- used by spectral loss modes
# ----------------------------------------------------------------------------
def _stft_kernel(frames_ref, basis_ref, out_ref):
    # (TM, fft_len) bf16 @ (fft_len, Fc) bf16 -> f32 accumulate -> bf16 store
    out_ref[...] = jnp.dot(
        frames_ref[...], basis_ref[...],
        preferred_element_type=jnp.float32).astype(out_ref.dtype)


@lru_cache(maxsize=None)
def _windowed_rdft_basis(win_len: int, fft_len: int):
    """Combined [cos | -sin] real-DFT basis with the (rectangular, centered,
    zero-padded) window folded in.  Columns: re bins 0..N/2, im bins 1..N/2-1
    => exactly fft_len non-trivial columns for even fft_len (lane-dense)."""
    assert fft_len % 2 == 0, "basis packing assumes even fft_len"
    n_freq = fft_len // 2 + 1
    ncols = 2 * n_freq - 2                      # == fft_len for even fft_len
    fc = _round_up(ncols, 128)                  # lane-dense pad (no-op for 512)

    lpad = (fft_len - win_len) // 2
    window = np.zeros((fft_len,), np.float64)
    window[lpad:lpad + win_len] = 1.0           # torch.stft(window=None) semantics

    n = np.arange(fft_len)[:, None].astype(np.float64)
    k_re = np.arange(n_freq)[None, :].astype(np.float64)
    k_im = np.arange(1, n_freq - 1)[None, :].astype(np.float64)
    ang_re = 2.0 * np.pi * n * k_re / fft_len
    ang_im = 2.0 * np.pi * n * k_im / fft_len

    basis = np.zeros((fft_len, fc), np.float32)
    basis[:, :n_freq] = (np.cos(ang_re) * window[:, None]).astype(np.float32)
    basis[:, n_freq:ncols] = (-np.sin(ang_im) * window[:, None]).astype(np.float32)
    return jnp.asarray(basis, dtype=jnp.bfloat16)


def stft_packed(x, win_len=400, win_inc=100, fft_len=512):
    """Core Pallas STFT: returns packed real/imag bf16 spectrogram rows
    (B*n_frames, fft_len) = [re bins 0..N/2 | im bins 1..N/2-1], plus metadata.
    Spectral losses should consume this directly (no complex/transpose tail)."""
    assert fft_len % 2 == 0
    B, T = x.shape
    n_freq = fft_len // 2 + 1
    pad = fft_len // 2
    assert T > pad, "reflect padding requires signal length > fft_len // 2"

    # bf16 BEFORE the pad/gather: the 5.12x-expanded frame copy is half the bytes
    # and there is no separate full-size astype pass afterwards.
    x_bf = x.astype(jnp.bfloat16)
    x_pad = jnp.pad(x_bf, ((0, 0), (pad, pad)), mode="reflect")   # center=True
    n_frames = 1 + (x_pad.shape[1] - fft_len) // win_inc

    # frame extraction (window folded into the DFT basis -> no windowing pass)
    starts = jnp.arange(n_frames) * win_inc
    idx = starts[:, None] + jnp.arange(fft_len)[None, :]          # (n_frames, fft_len)
    frames = x_pad[:, idx]                                        # (B, n_frames, fft_len) bf16

    M = B * n_frames
    frames2d = frames.reshape(M, fft_len)

    # row tiling: TM rows / grid step (bounded VMEM, pipelined DMA, megacore)
    TM = min(1024, _round_up(M, 8))
    Mp = _round_up(M, TM)
    if Mp != M:
        frames2d = jnp.pad(frames2d, ((0, Mp - M), (0, 0)))

    basis = _windowed_rdft_basis(win_len, fft_len)                # (fft_len, Fc) bf16
    Fc = basis.shape[1]

    out = pl.pallas_call(
        _stft_kernel,
        out_shape=jax.ShapeDtypeStruct((Mp, Fc), jnp.bfloat16),
        grid=(Mp // TM,),
        in_specs=[
            pl.BlockSpec((TM, fft_len), lambda i: (i, 0)),        # frames: tiled rows
            pl.BlockSpec((fft_len, Fc), lambda i: (0, 0)),        # basis: VMEM-resident
        ],
        out_specs=pl.BlockSpec((TM, Fc), lambda i: (i, 0)),
        compiler_params=pltpu.CompilerParams(
            dimension_semantics=("parallel",),
            vmem_limit_bytes=48 * 1024 * 1024,
        ),
    )(frames2d, basis)

    return out[:M], B, n_frames, n_freq


def stft_forward(x, win_len=400, win_inc=100, fft_len=512):
    """Matches torch.stft(x, fft_len, win_inc, win_len, return_complex=True) with
    center=True, pad_mode='reflect', window=None (bf16 compute, ~0.4% rel. err).
    The complex64 assembly / transpose below is XLA glue only needed to reproduce
    torch.stft's output layout; loss code should use stft_packed() instead."""
    packed, B, n_frames, n_freq = stft_packed(x, win_len, win_inc, fft_len)
    ncols = 2 * n_freq - 2
    M = B * n_frames
    re = packed[:, :n_freq].astype(jnp.float32)                   # bins 0..N/2
    im_mid = packed[:, n_freq:ncols].astype(jnp.float32)          # bins 1..N/2-1
    zcol = jnp.zeros((M, 1), jnp.float32)
    im = jnp.concatenate([zcol, im_mid, zcol], axis=1)            # im(0)=im(N/2)=0
    spec = (re + 1j * im).astype(jnp.complex64).reshape(B, n_frames, n_freq)
    return jnp.transpose(spec, (0, 2, 1))                         # (B, n_freq, n_frames)


# ----------------------------------------------------------------------------
# Pure-JAX references
# ----------------------------------------------------------------------------
def _reference_neg_snr_loss(s1, s_target, eps=EPS):
    e = s1 - s_target
    t = jnp.sum(s_target * s_target, -1, keepdims=True)
    n = jnp.sum(e * e, -1, keepdims=True)
    snr = 10.0 * jnp.log10(t / (n + eps) + eps)
    return -jnp.mean(snr)


def _reference_stft(x, win_len=400, win_inc=100, fft_len=512):
    pad = fft_len // 2
    x_pad = jnp.pad(x, ((0, 0), (pad, pad)), mode="reflect")
    n_frames = 1 + (x_pad.shape[1] - fft_len) // win_inc
    lpad = (fft_len - win_len) // 2
    window = jnp.zeros((fft_len,), jnp.float32).at[lpad:lpad + win_len].set(1.0)
    starts = jnp.arange(n_frames) * win_inc
    idx = starts[:, None] + jnp.arange(fft_len)[None, :]
    frames = x_pad[:, idx] * window[None, None, :]
    spec = jnp.fft.rfft(frames, n=fft_len, axis=-1).astype(jnp.complex64)
    return jnp.transpose(spec, (0, 2, 1))


if __name__ == "__main__":
    key = jax.random.PRNGKey(0)
    k1, k2 = jax.random.split(key)
    B, T = 2, 800
    model_output = jax.random.normal(k1, (B, T), dtype=jnp.float32)
    targets = jax.random.normal(k2, (B, T), dtype=jnp.float32)

    # 1) default Loss.forward (SI-SNR mode) via Pallas
    loss = jax.block_until_ready(loss_forward(model_output, targets, "SI-SNR"))
    loss_ref = jax.block_until_ready(_reference_neg_snr_loss(model_output, targets))
    assert loss.shape == (), loss.shape
    assert abs(float(loss) - float(loss_ref)) <= 1e-3 * max(1.0, abs(float(loss_ref))), \
        (float(loss), float(loss_ref))

    # 2) STFT kernel (spectral path of the Loss module)
    spec = jax.block_until_ready(stft_forward(targets))
    spec_ref = jax.block_until_ready(_reference_stft(targets))
    scale = float(jnp.max(jnp.abs(spec_ref)))
    err = float(jnp.max(jnp.abs(spec - spec_ref)))
    assert spec.shape == (B, 512 // 2 + 1, 1 + T // 100), spec.shape
    assert spec.dtype == jnp.complex64, spec.dtype
    assert err <= 5e-2 * scale, (err, scale)

    print("KERNEL_OK")
</pallas_src>

<mosaic_0001>
module attributes {stable_mosaic.version = 11 : i64} {
  func.func @_snr_rows_kernel(%arg0: i32, %arg1: i32, %arg2: memref<8x896xf32, #tpu.memory_space<vmem>>, %arg3: memref<8x896xf32, #tpu.memory_space<vmem>>, %arg4: memref<8x1xf32, #tpu.memory_space<vmem>>, %arg5: memref<8x1xf32, #tpu.memory_space<vmem>>, %arg6: memref<8x1xf32, #tpu.memory_space<vmem>>) attributes {dimension_semantics = [#tpu.dimension_semantics<parallel>, #tpu.dimension_semantics<arbitrary>], iteration_bounds = array<i64: 1, 1>, scalar_prefetch = 0 : i64, scratch_operands = 2 : i64, tpu.core_type = #tpu.core_type<tc>, window_params = [{transform_indices = @transform_0, window_bounds = array<i64: 8, 896>}, {transform_indices = @transform_1, window_bounds = array<i64: 8, 896>}, {transform_indices = @transform_2, window_bounds = array<i64: 8, 1>}]} {
    %c0_i32 = arith.constant 0 : i32
    %0 = arith.cmpi eq, %arg1, %c0_i32 : i32
    %1 = arith.extui %0 : i1 to i32
    %c0_i32_0 = arith.constant 0 : i32
    %2 = arith.cmpi ne, %1, %c0_i32_0 : i32
    scf.if %2 {
      %cst_15 = arith.constant 0.000000e+00 : f32
      %21 = vector.broadcast %cst_15 : f32 to vector<8x1xf32>
      %c0_16 = arith.constant 0 : index
      %c0_17 = arith.constant 0 : index
      %22 = vector.load %arg5[%c0_16, %c0_17] : memref<8x1xf32, #tpu.memory_space<vmem>>, vector<8x1xf32>
      tpu.vector_store %arg5[%c0_16, %c0_17], %21 {strides = array<i32>} : memref<8x1xf32, #tpu.memory_space<vmem>>, vector<8x1xf32>,
      %cst_18 = arith.constant 0.000000e+00 : f32
      %23 = vector.broadcast %cst_18 : f32 to vector<8x1xf32>
      %c0_19 = arith.constant 0 : index
      %c0_20 = arith.constant 0 : index
      %24 = vector.load %arg6[%c0_19, %c0_20] : memref<8x1xf32, #tpu.memory_space<vmem>>, vector<8x1xf32>
      tpu.vector_store %arg6[%c0_19, %c0_20], %23 {strides = array<i32>} : memref<8x1xf32, #tpu.memory_space<vmem>>, vector<8x1xf32>,
    } else {
    }
    %c0 = arith.constant 0 : index
    %c0_1 = arith.constant 0 : index
    %3 = vector.load %arg2[%c0, %c0_1] : memref<8x896xf32, #tpu.memory_space<vmem>>, vector<8x896xf32>
    %c0_2 = arith.constant 0 : index
    %c0_3 = arith.constant 0 : index
    %4 = vector.load %arg3[%c0_2, %c0_3] : memref<8x896xf32, #tpu.memory_space<vmem>>, vector<8x896xf32>
    %5 = arith.subf %3, %4 : vector<8x896xf32>
    %c0_4 = arith.constant 0 : index
    %c0_5 = arith.constant 0 : index
    %6 = vector.load %arg5[%c0_4, %c0_5] : memref<8x1xf32, #tpu.memory_space<vmem>>, vector<8x1xf32>
    %7 = arith.mulf %4, %4 : vector<8x896xf32>
    %cst = arith.constant dense<0.000000e+00> : vector<8xf32>
    %8 = vector.multi_reduction <add>, %7, %cst [1] : vector<8x896xf32> to vector<8xf32>
    %9 = vector.shape_cast %8 : vector<8xf32> to vector<8x1xf32>
    %10 = arith.addf %6, %9 : vector<8x1xf32>
    %c0_6 = arith.constant 0 : index
    %c0_7 = arith.constant 0 : index
    %11 = vector.load %arg5[%c0_6, %c0_7] : memref<8x1xf32, #tpu.memory_space<vmem>>, vector<8x1xf32>
    tpu.vector_store %arg5[%c0_6, %c0_7], %10 {strides = array<i32>} : memref<8x1xf32, #tpu.memory_space<vmem>>, vector<8x1xf32>,
    %c0_8 = arith.constant 0 : index
    %c0_9 = arith.constant 0 : index
    %12 = vector.load %arg6[%c0_8, %c0_9] : memref<8x1xf32, #tpu.memory_space<vmem>>, vector<8x1xf32>
    %13 = arith.mulf %5, %5 : vector<8x896xf32>
    %cst_10 = arith.constant dense<0.000000e+00> : vector<8xf32>
    %14 = vector.multi_reduction <add>, %13, %cst_10 [1] : vector<8x896xf32> to vector<8xf32>
    %15 = vector.shape_cast %14 : vector<8xf32> to vector<8x1xf32>
    %16 = arith.addf %12, %15 : vector<8x1xf32>
    %c0_11 = arith.constant 0 : index
    %c0_12 = arith.constant 0 : index
    %17 = vector.load %arg6[%c0_11, %c0_12] : memref<8x1xf32, #tpu.memory_space<vmem>>, vector<8x1xf32>
    tpu.vector_store %arg6[%c0_11, %c0_12], %16 {strides = array<i32>} : memref<8x1xf32, #tpu.memory_space<vmem>>, vector<8x1xf32>,
    %c0_i32_13 = arith.constant 0 : i32
    %18 = arith.cmpi eq, %arg1, %c0_i32_13 : i32
    %19 = arith.extui %18 : i1 to i32
    %c0_i32_14 = arith.constant 0 : i32
    %20 = arith.cmpi ne, %19, %c0_i32_14 : i32
    scf.if %20 {
      %c0_15 = arith.constant 0 : index
      %c0_16 = arith.constant 0 : index
      %21 = vector.load %arg5[%c0_15, %c0_16] : memref<8x1xf32, #tpu.memory_space<vmem>>, vector<8x1xf32>
      %c0_17 = arith.constant 0 : index
      %c0_18 = arith.constant 0 : index
      %22 = vector.load %arg6[%c0_17, %c0_18] : memref<8x1xf32, #tpu.memory_space<vmem>>, vector<8x1xf32>
      %cst_19 = arith.constant 9.99999997E-7 : f32
      %23 = vector.broadcast %cst_19 : f32 to vector<8x1xf32>
      %24 = arith.addf %22, %23 : vector<8x1xf32>
      %25 = arith.divf %21, %24 : vector<8x1xf32>
      %cst_20 = arith.constant 9.99999997E-7 : f32
      %26 = vector.broadcast %cst_20 : f32 to vector<8x1xf32>
      %27 = arith.addf %25, %26 : vector<8x1xf32>
      %28 = math.log %27 : vector<8x1xf32>
      %cst_21 = arith.constant 4.34294462 : f32
      %29 = vector.broadcast %cst_21 : f32 to vector<8x1xf32>
      %30 = arith.mulf %29, %28 : vector<8x1xf32>
      %c0_22 = arith.constant 0 : index
      %c0_23 = arith.constant 0 : index
      %31 = vector.load %arg4[%c0_22, %c0_23] : memref<8x1xf32, #tpu.memory_space<vmem>>, vector<8x1xf32>
      tpu.vector_store %arg4[%c0_22, %c0_23], %30 {strides = array<i32>} : memref<8x1xf32, #tpu.memory_space<vmem>>, vector<8x1xf32>,
    } else {
    }
    return
  }
  func.func @transform_0(%arg0: i32, %arg1: i32) -> (i32, i32) {
    %c0_i32 = arith.constant 0 : i32
    return %arg0, %arg1 : i32, i32
  }
  func.func @transform_1(%arg0: i32, %arg1: i32) -> (i32, i32) {
    %c0_i32 = arith.constant 0 : i32
    return %arg0, %arg1 : i32, i32
  }
  func.func @transform_2(%arg0: i32, %arg1: i32) -> (i32, i32) {
    %c0_i32 = arith.constant 0 : i32
    %c0_i32_0 = arith.constant 0 : i32
    return %arg0, %c0_i32 : i32, i32
  }
}

</mosaic_0001>

<llo_original>
// kernel: tpu_custom_call.1
$region0: #{tpu_custom_call.1}
  #allocation0 [shape = 'u32[]', space=smem, size = 0x4, offset = 0x4, fixed_abs, tag = 'smem constant byte address 0x4 - core index']
  #allocation1 [shape = 'u32[72,128]{1,0:T(1,128)}', space=vmem, size = 0x9000, scoped, tag = 'internal scratch']
  #allocation2 [shape = 'f32[8,1]{1,0:T(8,128)}', space=vmem, size = 0x1000, scoped, tag = 'scratch operand']
  #allocation3 [shape = 'f32[8,1]{1,0:T(8,128)}', space=vmem, size = 0x1000, scoped, tag = 'scratch operand']
  %s0 = inlined_call_operand.hbm [shape: f32[8,896], index: 0, kind: input, shape index: {}]
  %s1 = inlined_call_operand.hbm [shape: f32[8,896], index: 1, kind: input, shape index: {}]
  %s2 = inlined_call_operand.vmem [shape: f32[8,1], index: 2, kind: output, shape index: {}]
  %s3 = sld [smem:[#allocation0]]
  $region34: #{tpu_custom_call.1} parent=0
    _
  %s5 = ssub.s32 1, %s3
  %s6 = scalar_select 0, %s5, %s3
  $region1: #{tpu_custom_call.1} parent=0
    #allocation4 [shape = 'u8[28672]{0}', space=vmem, size = 0x7000, scoped, tag = 'input window, operand 0, single buffered']
    #allocation5 [shape = 's32[1]{0}', space=sflag, size = 0x4, scoped, tag = 'scoped memory for tpu_custom_call.1']
    #allocation6 [shape = 'u8[28672]{0}', space=vmem, size = 0x7000, scoped, tag = 'input window, operand 1, single buffered']
    #allocation7 [shape = 's32[1]{0}', space=sflag, size = 0x4, scoped, tag = 'scoped memory for tpu_custom_call.1']
    %7 = vsyncpa [#allocation5], 0
    %8 = vsyncpa [#allocation7], 0
    // Predicated region
    $region2: #{tpu_custom_call.1} parent=1 // pred_check
      _
    $region3: #{tpu_custom_call.1} parent=1 // pred_check_branch
      %10 = sbr.rel (0) target = $region5
    $region4: #{tpu_custom_call.1} parent=1 // pred_region
      %12 = vsyncadd [#allocation5], 0
      %s14 = sshll.u32 %s0, 4
      %s15 = int_to_ptr.hbm [resolvable:$true] %s14
      %s16 = sshll.u32 [#allocation4], 4
      %s17 = int_to_ptr.vmem [resolvable:$true] %s16
      %19 = dma.hbm_to_vmem [thread:$0]  %s15, 896, %s17, [#allocation5]
    $region5: #{tpu_custom_call.1} parent=1 // pred_fallthru
      _
    // Predicated region
    $region6: #{tpu_custom_call.1} parent=1 // pred_check
      _
    $region7: #{tpu_custom_call.1} parent=1 // pred_check_branch
      %21 = sbr.rel (0) target = $region9
    $region8: #{tpu_custom_call.1} parent=1 // pred_region
      %23 = vsyncadd [#allocation7], 0
      %s25 = sshll.u32 %s1, 4
      %s26 = int_to_ptr.hbm [resolvable:$true] %s25
      %s27 = sshll.u32 [#allocation6], 4
      %s28 = int_to_ptr.vmem [resolvable:$true] %s27
      %30 = dma.hbm_to_vmem [thread:$0]  %s26, 896, %s28, [#allocation7]
    $region9: #{tpu_custom_call.1} parent=1 // pred_fallthru
      _
    // Predicated region
    $region10: #{tpu_custom_call.1} parent=1 // pred_check
      _
    $region11: #{tpu_custom_call.1} parent=1 // pred_check_branch
      %32 = sbr.rel (0) target = $region13
    $region12: #{tpu_custom_call.1} parent=1 // pred_region
      %34 = dma.done [#allocation5], 896
    $region13: #{tpu_custom_call.1} parent=1 // pred_fallthru
      _
    // Predicated region
    $region14: #{tpu_custom_call.1} parent=1 // pred_check
      _
    $region15: #{tpu_custom_call.1} parent=1 // pred_check_branch
      %36 = sbr.rel (0) target = $region17
    $region16: #{tpu_custom_call.1} parent=1 // pred_region
      %38 = dma.done [#allocation7], 896
    $region17: #{tpu_custom_call.1} parent=1 // pred_fallthru
      _
    %p39 = scmp.eq.s32.totalorder 0, 0
    // Predicated region
    $region18: #{tpu_custom_call.1} parent=1 // pred_check
      %p40 = pneg %p39
    $region19: #{tpu_custom_call.1} parent=1 // pred_check_branch
      %42 = sbr.rel (%p40) target = $region21
    $region20: #{tpu_custom_call.1} parent=1 // pred_region
      %vm43 = vcmask 7168
      %44 = vst.msk [vmem:[#allocation2] sm:$0xff] %vm43, 0.0
      %45 = vst.msk [vmem:[#allocation3] sm:$0xff] %vm43, 0.0
    $region21: #{tpu_custom_call.1} parent=1 // pred_fallthru
      _
    %v46 = vld [vmem:[#allocation4] sm:$0xff]
    %v47 = vld [vmem:[#allocation4 + $0x8] sm:$0xff]
    %v48 = vld [vmem:[#allocation4 + $0x10] sm:$0xff]
    %v49 = vld [vmem:[#allocation4 + $0x18] sm:$0xff]
    %v50 = vld [vmem:[#allocation4 + $0x20] sm:$0xff]
    %v51 = vld [vmem:[#allocation4 + $0x28] sm:$0xff]
    %v52 = vld [vmem:[#allocation4 + $0x30] sm:$0xff]
    %v53 = vld [vmem:[#allocation6] sm:$0xff]
    %v54 = vld [vmem:[#allocation6 + $0x8] sm:$0xff]
    %v55 = vld [vmem:[#allocation6 + $0x10] sm:$0xff]
    %v56 = vld [vmem:[#allocation6 + $0x18] sm:$0xff]
    %v57 = vld [vmem:[#allocation6 + $0x20] sm:$0xff]
    %v58 = vld [vmem:[#allocation6 + $0x28] sm:$0xff]
    %v59 = vld [vmem:[#allocation6 + $0x30] sm:$0xff]
    %v60 = vsub.f32 %v46, %v53
    %v61 = vsub.f32 %v47, %v54
    %v62 = vsub.f32 %v48, %v55
    %v63 = vsub.f32 %v49, %v56
    %v64 = vsub.f32 %v50, %v57
    %v65 = vsub.f32 %v51, %v58
    %v66 = vsub.f32 %v52, %v59
    %v67 = vld [vmem:[#allocation2] sm:$0xff]
    %v68 = vmul.f32 %v53, %v53
    %v69 = vmul.f32 %v54, %v54
    %v70 = vmul.f32 %v55, %v55
    %v71 = vmul.f32 %v56, %v56
    %v72 = vmul.f32 %v57, %v57
    %v73 = vmul.f32 %v58, %v58
    %v74 = vmul.f32 %v59, %v59
    %v75 = vadd.f32 %v68, %v69
    %v76 = vadd.f32 %v75, %v70
    %v77 = vadd.f32 %v76, %v71
    %v78 = vadd.f32 %v77, %v72
    %v79 = vadd.f32 %v78, %v73
    %v80 = vadd.f32 %v79, %v74
    %81 = vadd.xlane.f32.xlu0 %v80
    %v82 = vpop.xlane.xlu0 %81
    %v83 = vadd.f32 %v67, %v82
    %vm84 = vcmask 7168
    %85 = vst.msk [vmem:[#allocation2] sm:$0xff] %vm84, %v83
    %v86 = vld [vmem:[#allocation3] sm:$0xff]
    %v87 = vmul.f32 %v60, %v60
    %v88 = vmul.f32 %v61, %v61
    %v89 = vmul.f32 %v62, %v62
    %v90 = vmul.f32 %v63, %v63
    %v91 = vmul.f32 %v64, %v64
    %v92 = vmul.f32 %v65, %v65
    %v93 = vmul.f32 %v66, %v66
    %v94 = vadd.f32 %v87, %v88
    %v95 = vadd.f32 %v94, %v89
    %v96 = vadd.f32 %v95, %v90
    %v97 = vadd.f32 %v96, %v91
    %v98 = vadd.f32 %v97, %v92
    %v99 = vadd.f32 %v98, %v93
    %100 = vadd.xlane.f32.xlu0 %v99
    %v101 = vpop.xlane.xlu0 %100
    %v102 = vadd.f32 %v86, %v101
    %103 = vst.msk [vmem:[#allocation3] sm:$0xff] %vm84, %v102
    // Predicated region
    $region22: #{tpu_custom_call.1} parent=1 // pred_check
      %p104 = pneg %p39
    $region23: #{tpu_custom_call.1} parent=1 // pred_check_branch
      %106 = sbr.rel (%p104) target = $region25
    $region24: #{tpu_custom_call.1} parent=1 // pred_region
      %v107 = vld [vmem:[#allocation2] sm:$0xff]
      %v108 = vld [vmem:[#allocation3] sm:$0xff]
      %v109 = vadd.f32 %v108, 1e-06
      %v110 = vrcp.pop %v109
      %v111 = vmul.f32 %v109, %v110
      %v112 = vsub.f32 1.0, %v111
      %v113 = vmul.f32 %v110, %v112
      %v114 = vadd.f32 %v110, %v113
      %vm115 = vweird.f32 %v109
      %vm116 = vweird.f32 %v110
      %vm117 = vmor %vm115, %vm116
      %v118 = vsel %vm117, %v110, %v114
      %v119 = vand.u32 2147483647, %v109
      %vm120 = vcmp.eq.f32.partialorder %v119, 8.507059e+37
      %v121 = vand.u32 %v109, 2147483648
      %v122 = vor.u32 1.1754944e-38, %v121
      %v123 = vsel %vm120, %v122, %v118
      %v124 = vmul.f32 %v107, %v123
      %v125 = vadd.f32 %v124, 1e-06
      %v126 = vlog2.pop %v125
      %v127 = vmul.f32 %v126, 0.6931472
      %v128 = vmul.f32 %v127, 4.3429446
      %129 = vst.msk [vmem:[%s2] sm:$0xff] %vm84, %v128
    $region25: #{tpu_custom_call.1} parent=1 // pred_fallthru
      _
    // Predicated region
    $region26: #{tpu_custom_call.1} parent=1 // pred_check
      _
    $region27: #{tpu_custom_call.1} parent=1 // pred_check_branch
      %131 = sbr.rel (0) target = $region29
    $region28: #{tpu_custom_call.1} parent=1 // pred_region
      _
    $region29: #{tpu_custom_call.1} parent=1 // pred_fallthru
      _
    // Predicated region
    $region30: #{tpu_custom_call.1} parent=1 // pred_check
      _
    $region31: #{tpu_custom_call.1} parent=1 // pred_check_branch
      %133 = sbr.rel (0) target = $region33
    $region32: #{tpu_custom_call.1} parent=1 // pred_region
      _
    $region33: #{tpu_custom_call.1} parent=1 // pred_fallthru
      _
    %134 = vsyncpa [#allocation5], 1
    %135 = vsyncpa [#allocation7], 1

</llo_original>
